<compile_context>
chip_gen: v5e
topology: v5e:2x2
jax: 0.10.0
libtpu: 0.0.40
codegen_flags: <defaults>
</compile_context>

<pallas_src>
import functools

import jax
import jax.numpy as jnp
from jax import lax
from jax.experimental import pallas as pl
from jax.experimental.pallas import tpu as pltpu


def _round_up(x: int, m: int) -> int:
    return (x + m - 1) // m * m


# ---------------------------------------------------------------------------
# Kernel: one fused gather per token tile.
# ---------------------------------------------------------------------------
def _fused_embedding_kernel(word_ref, pos1_ref, pos2_ref, table_ref, out_ref, *, vw, vp):
    """Combined one-hot (TN, Vpad) @ block-diagonal table (Vpad, Dpad) -> (TN, Dpad).

    word_ref/pos1_ref/pos2_ref : (TN, 1) int32  -- raw ids (offsets added here)
    table_ref                  : (Vpad, Dpad) f32 -- block-diagonal fused table
    out_ref                    : (TN, Dpad) f32   -- [word | pos1 | pos2 | zero-pad]
    """
    tn = out_ref.shape[0]
    vpad = table_ref.shape[0]

    w = word_ref[...]                          # (TN, 1)
    p1 = pos1_ref[...] + vw                    # offset into pos1 block of fused table
    p2 = pos2_ref[...] + (vw + vp)             # offset into pos2 block of fused table

    # One iota, three compares (disjoint id ranges), one OR -> a single one-hot whose
    # matmul against the block-diagonal table yields the concatenation.
    iota = lax.broadcasted_iota(jnp.int32, (tn, vpad), 1)
    onehot = ((iota == w) | (iota == p1) | (iota == p2)).astype(table_ref.dtype)

    # Single MXU matmul + single contiguous, lane-dense (multiple-of-128) store.
    out_ref[...] = jnp.dot(
        onehot, table_ref[...], preferred_element_type=jnp.float32
    ).astype(out_ref.dtype)


# ---------------------------------------------------------------------------
# Init-time fusion of the three tables into one block-diagonal table.
# ---------------------------------------------------------------------------
def build_fused_table(word_table, pos1_table, pos2_table):
    """Block-diagonal table, rows padded to a multiple of 128 (MXU K alignment) and
    columns padded to a multiple of 128 (lane-dense output stores)."""
    vw, dw = word_table.shape
    vp, dp = pos1_table.shape
    d = dw + 2 * dp
    dpad = _round_up(d, 128)
    vtot = vw + 2 * vp
    vpad = _round_up(vtot, 128)

    fused = jnp.zeros((vpad, dpad), dtype=jnp.float32)
    fused = fused.at[:vw, :dw].set(word_table.astype(jnp.float32))
    fused = fused.at[vw:vw + vp, dw:dw + dp].set(pos1_table.astype(jnp.float32))
    fused = fused.at[vw + vp:vtot, dw + dp:d].set(pos2_table.astype(jnp.float32))
    return fused


# ---------------------------------------------------------------------------
# Forward wrapper.
# ---------------------------------------------------------------------------
def embedding_forward(word, pos1, pos2, fused_table, vw, vp, d_out, *, token_tile=1024):
    """Returns (B, L, Dw + 2*Dp) float32, matching torch.cat([...], 2)."""
    b, l = word.shape
    n = b * l
    vpad, dpad = fused_table.shape

    # Token tile: multiple of 8 (sublane constraint), capped by token_tile, and chosen
    # so there are >=2 grid steps whenever n > 8 (v7x megacore sharding).
    tn = min(_round_up(token_tile, 8), max(8, _round_up((n + 1) // 2, 8)))
    tn = _round_up(tn, 8)
    grid = (pl.cdiv(n, tn),)   # partial last block masked by Pallas -- no row padding

    # Metadata-only reshapes; no stack / add / concat in the wrapper.
    word_ids = word.reshape(n, 1).astype(jnp.int32)
    pos1_ids = pos1.reshape(n, 1).astype(jnp.int32)
    pos2_ids = pos2.reshape(n, 1).astype(jnp.int32)

    kernel = functools.partial(_fused_embedding_kernel, vw=vw, vp=vp)

    out = pl.pallas_call(
        kernel,
        out_shape=jax.ShapeDtypeStruct((n, dpad), jnp.float32),
        grid=grid,
        in_specs=[
            pl.BlockSpec((tn, 1), lambda i: (i, 0)),        # word ids, per tile
            pl.BlockSpec((tn, 1), lambda i: (i, 0)),        # pos1 ids, per tile
            pl.BlockSpec((tn, 1), lambda i: (i, 0)),        # pos2 ids, per tile
            pl.BlockSpec((vpad, dpad), lambda i: (0, 0)),   # fused table, resident
        ],
        out_specs=pl.BlockSpec((tn, dpad), lambda i: (i, 0)),   # lane-dense store
        compiler_params=pltpu.CompilerParams(
            dimension_semantics=("parallel",),              # megacore on v7x
        ),
    )(word_ids, pos1_ids, pos2_ids, fused_table)

    # Single feature-dim slice back to the real width (review: "slice once at the end";
    # downstream consumers could instead keep the 128-wide padded activations).
    return out[:, :d_out].reshape(b, l, d_out)


if __name__ == "__main__":
    # Small, module-consistent shapes.
    B = 2                  # batch
    L = 8                  # sequence length (== max_length)
    VOCAB = 50             # word_embedder vocab size
    WORD_DIM = 32          # word_embedder.word_vec_dim
    POS_DIM = 5            # pos_embedding_dim
    MAX_LENGTH = L
    POS_VOCAB = 2 * MAX_LENGTH

    key = jax.random.PRNGKey(0)
    k_wt, k_p1t, k_p2t, k_w, k_p1, k_p2 = jax.random.split(key, 6)

    # Deterministic synthetic parameters (no checkpoint load).
    word_table = jax.random.normal(k_wt, (VOCAB, WORD_DIM), dtype=jnp.float32)
    pos1_table = jax.random.normal(k_p1t, (POS_VOCAB, POS_DIM), dtype=jnp.float32)
    pos2_table = jax.random.normal(k_p2t, (POS_VOCAB, POS_DIM), dtype=jnp.float32)
    # nn.Embedding(padding_idx=0): row 0 is zeros (forward-time semantics).
    pos1_table = pos1_table.at[0].set(0.0)
    pos2_table = pos2_table.at[0].set(0.0)

    # Build the fused block-diagonal table ONCE (init-time work, not per forward).
    fused_table = build_fused_table(word_table, pos1_table, pos2_table)

    # Example inputs (inputs['word'], inputs['pos1'], inputs['pos2']).
    word = jax.random.randint(k_w, (B, L), 0, VOCAB, dtype=jnp.int32)
    pos1 = jax.random.randint(k_p1, (B, L), 0, POS_VOCAB, dtype=jnp.int32)
    pos2 = jax.random.randint(k_p2, (B, L), 0, POS_VOCAB, dtype=jnp.int32)

    D_OUT = WORD_DIM + 2 * POS_DIM
    out = embedding_forward(word, pos1, pos2, fused_table, VOCAB, POS_VOCAB, D_OUT)
    out = jax.block_until_ready(out)

    # Pure-JAX reference (torch.cat([emb(word), emb(pos1), emb(pos2)], 2)).
    ref = jnp.concatenate(
        [
            jnp.take(word_table, word, axis=0),
            jnp.take(pos1_table, pos1, axis=0),
            jnp.take(pos2_table, pos2, axis=0),
        ],
        axis=2,
    )

    assert out.shape == (B, L, D_OUT), out.shape
    assert jnp.allclose(out, ref, atol=1e-5, rtol=1e-5), "mismatch vs reference"
    print("KERNEL_OK")
</pallas_src>

<mosaic_0001>
module attributes {stable_mosaic.version = 11 : i64} {
  func.func @_fused_embedding_kernel(%arg0: i32, %arg1: memref<8x1xi32, #tpu.memory_space<vmem>>, %arg2: memref<8x1xi32, #tpu.memory_space<vmem>>, %arg3: memref<8x1xi32, #tpu.memory_space<vmem>>, %arg4: memref<128x128xf32, #tpu.memory_space<vmem>>, %arg5: memref<8x128xf32, #tpu.memory_space<vmem>>) attributes {dimension_semantics = [#tpu.dimension_semantics<parallel>], iteration_bounds = array<i64: 2>, scalar_prefetch = 0 : i64, scratch_operands = 0 : i64, tpu.core_type = #tpu.core_type<tc>, window_params = [{transform_indices = @transform_0, window_bounds = array<i64: 8, 1>}, {transform_indices = @transform_1, window_bounds = array<i64: 8, 1>}, {transform_indices = @transform_2, window_bounds = array<i64: 8, 1>}, {pipeline_mode = #tpu.pipeline_mode<synchronous>, transform_indices = @transform_3, window_bounds = array<i64: 128, 128>}, {transform_indices = @transform_4, window_bounds = array<i64: 8, 128>}]} {
    %c0 = arith.constant 0 : index
    %c0_0 = arith.constant 0 : index
    %0 = vector.load %arg1[%c0, %c0_0] : memref<8x1xi32, #tpu.memory_space<vmem>>, vector<8x1xi32>
    %c0_1 = arith.constant 0 : index
    %c0_2 = arith.constant 0 : index
    %1 = vector.load %arg2[%c0_1, %c0_2] : memref<8x1xi32, #tpu.memory_space<vmem>>, vector<8x1xi32>
    %c50_i32 = arith.constant 50 : i32
    %2 = vector.broadcast %c50_i32 : i32 to vector<8x1xi32>
    %3 = arith.addi %1, %2 : vector<8x1xi32>
    %c0_3 = arith.constant 0 : index
    %c0_4 = arith.constant 0 : index
    %4 = vector.load %arg3[%c0_3, %c0_4] : memref<8x1xi32, #tpu.memory_space<vmem>>, vector<8x1xi32>
    %c66_i32 = arith.constant 66 : i32
    %5 = vector.broadcast %c66_i32 : i32 to vector<8x1xi32>
    %6 = arith.addi %4, %5 : vector<8x1xi32>
    %7 = tpu.iota {dimensions = array<i32: 1>} : vector<8x128xi32>
    %8 = vector.broadcast %0 : vector<8x1xi32> to vector<8x128xi32>
    %9 = arith.cmpi eq, %7, %8 : vector<8x128xi32>
    %10 = vector.broadcast %3 : vector<8x1xi32> to vector<8x128xi32>
    %11 = arith.cmpi eq, %7, %10 : vector<8x128xi32>
    %12 = arith.ori %9, %11 : vector<8x128xi1>
    %13 = vector.broadcast %6 : vector<8x1xi32> to vector<8x128xi32>
    %14 = arith.cmpi eq, %7, %13 : vector<8x128xi32>
    %15 = arith.ori %12, %14 : vector<8x128xi1>
    %16 = arith.extui %15 : vector<8x128xi1> to vector<8x128xi32>
    %17 = arith.sitofp %16 : vector<8x128xi32> to vector<8x128xf32>
    %c0_5 = arith.constant 0 : index
    %c0_6 = arith.constant 0 : index
    %18 = vector.load %arg4[%c0_5, %c0_6] : memref<128x128xf32, #tpu.memory_space<vmem>>, vector<128x128xf32>
    %cst = arith.constant dense<0.000000e+00> : vector<8x128xf32>
    %19 = tpu.matmul %17, %18, %cst {dimension_numbers = #tpu.dot_dimension_numbers<[1], [0], [0], [1], [0, 0, 1, 1], [], []>} : vector<8x128xf32>, vector<128x128xf32>, vector<8x128xf32> -> vector<8x128xf32>
    %c0_7 = arith.constant 0 : index
    %c0_8 = arith.constant 0 : index
    %20 = vector.load %arg5[%c0_7, %c0_8] : memref<8x128xf32, #tpu.memory_space<vmem>>, vector<8x128xf32>
    tpu.vector_store %arg5[%c0_7, %c0_8], %19 {strides = array<i32>} : memref<8x128xf32, #tpu.memory_space<vmem>>, vector<8x128xf32>,
    return
  }
  func.func @transform_0(%arg0: i32) -> (i32, i32) {
    %c0_i32 = arith.constant 0 : i32
    %c0_i32_0 = arith.constant 0 : i32
    return %arg0, %c0_i32 : i32, i32
  }
  func.func @transform_1(%arg0: i32) -> (i32, i32) {
    %c0_i32 = arith.constant 0 : i32
    %c0_i32_0 = arith.constant 0 : i32
    return %arg0, %c0_i32 : i32, i32
  }
  func.func @transform_2(%arg0: i32) -> (i32, i32) {
    %c0_i32 = arith.constant 0 : i32
    %c0_i32_0 = arith.constant 0 : i32
    return %arg0, %c0_i32 : i32, i32
  }
  func.func @transform_3(%arg0: i32) -> (i32, i32) {
    %c0_i32 = arith.constant 0 : i32
    %c0_i32_0 = arith.constant 0 : i32
    %c0_i32_1 = arith.constant 0 : i32
    return %c0_i32, %c0_i32_0 : i32, i32
  }
  func.func @transform_4(%arg0: i32) -> (i32, i32) {
    %c0_i32 = arith.constant 0 : i32
    %c0_i32_0 = arith.constant 0 : i32
    return %arg0, %c0_i32 : i32, i32
  }
}

</mosaic_0001>

<llo_original>
// kernel: tpu_custom_call.1
$region0: #{tpu_custom_call.1}
  #allocation0 [shape = 'u32[]', space=smem, size = 0x4, offset = 0x4, fixed_abs, tag = 'smem constant byte address 0x4 - core index']
  #allocation1 [shape = 'u32[72,128]{1,0:T(1,128)}', space=vmem, size = 0x9000, scoped, tag = 'internal scratch']
  %s0 = inlined_call_operand.vmem [shape: s32[16,1], index: 0, kind: input, shape index: {}]
  %s1 = inlined_call_operand.vmem [shape: s32[16,1], index: 1, kind: input, shape index: {}]
  %s2 = inlined_call_operand.vmem [shape: s32[16,1], index: 2, kind: input, shape index: {}]
  %s3 = inlined_call_operand.hbm [shape: f32[128,128], index: 3, kind: input, shape index: {}]
  %s4 = inlined_call_operand.hbm [shape: f32[16,128], index: 4, kind: output, shape index: {}]
  %s5 = sld [smem:[#allocation0]]
  $region53: #{tpu_custom_call.1} parent=0
    _
  %s7 = ssub.s32 1, %s5
  %s8 = scalar_select 0, %s7, %s5
  $region1: #{tpu_custom_call.1} parent=0
    #allocation2 [shape = 'u8[65536]{0}', space=vmem, size = 0x10000, scoped, tag = 'input window, operand 3, single buffered']
    #allocation3 [shape = 's32[2]{0}', space=sflag, size = 0x8, scoped, tag = 'scoped memory for tpu_custom_call.1']
    #allocation4 [shape = 's32[2]{0}', space=sflag, size = 0x8, scoped, tag = 'scoped memory for tpu_custom_call.1']
    #allocation5 [shape = 'u8[8192]{0}', space=vmem, size = 0x2000, scoped, tag = 'output window, operand 0']
    %9 = vsyncpa [#allocation3], 0
    %10 = vsyncpa [#allocation4], 0
    %s11 = scalar_lea.sflag [#allocation4], 1
    %12 = vsyncpa %s11, 0
    loop: start=0, step=1, limit=4
    $region2: #{tpu_custom_call.1} parent=1 // loop_pre_header
      _
    $region3: #{tpu_custom_call.1} parent=1 // loop_header
      %s14 = sphi 0, %s18
      %p15 = scmp.ge.s32.totalorder %s14, 4
      %s24 = sphi 0, %s26
      %s27 = sphi 0, %s24
      %s28 = sphi 0, %s27
      %s44 = sphi 0, %s28
      %s50 = sphi 0, %s52
      %s53 = sphi 0, %s50
      %s54 = sphi 0, %s53
      %s70 = sphi 0, %s54
      %s76 = sphi 0, %s78
      %s79 = sphi 0, %s76
      %s80 = sphi 0, %s79
      %s96 = sphi 0, %s80
      %s100 = sphi 0, %s100
      %s102 = sphi 0, %s100
      %s103 = sphi 0, %s102
      %s117 = sphi 0, %s103
      %s123 = sphi 0, %s125
      %s126 = sphi 0, %s123
      %s127 = sphi 0, %s126
      %s143 = sphi 0, %s127
    $region4: #{tpu_custom_call.1} parent=1 // loop_header_branch
      %17 = sbr.rel (%p15) target = $region8
    $region5: #{tpu_custom_call.1} parent=1 // loop_body
      %s19 = ssub.s32 %s14, 1
      %s20 = ssub.s32 %s14, 2
      %s21 = sadd.s32 %s14, 1
      %s22 = ssub.s32 %s14, %s21
      %p23 = scmp.eq.s32.totalorder %s22, 0
      %s25 = sadd.s32 %s24, 1
      %s26 = scalar_select %p23, %s24, %s25
      %p29 = pneg %p23
      %p30 = scmp.eq.s32.totalorder %s14, 1
      %p31 = por %p29, %p30
      %p32 = scmp.ne.s32.totalorder %s24, %s27
      %p33 = scmp.eq.s32.totalorder %s14, 0
      %p34 = por %p32, %p33
      %p35 = scmp.ne.s32.totalorder %s24, %s27
      %p36 = scmp.eq.s32.totalorder %s19, 1
      %p37 = por %p35, %p36
      %p38 = scmp.ne.s32.totalorder %s27, %s28
      %p39 = scmp.eq.s32.totalorder %s19, 0
      %p40 = por %p38, %p39
      %p41 = scmp.ne.s32.totalorder %s27, %s28
      %p42 = scmp.eq.s32.totalorder %s20, 1
      %p43 = por %p41, %p42
      %p45 = scmp.ne.s32.totalorder %s28, %s44
      %p46 = scmp.eq.s32.totalorder %s20, 0
      %p47 = por %p45, %p46
      %s48 = ssub.s32 %s14, %s21
      %p49 = scmp.eq.s32.totalorder %s48, 0
      %s51 = sadd.s32 %s50, 1
      %s52 = scalar_select %p49, %s50, %s51
      %p55 = pneg %p49
      %p56 = scmp.eq.s32.totalorder %s14, 1
      %p57 = por %p55, %p56
      %p58 = scmp.ne.s32.totalorder %s50, %s53
      %p59 = scmp.eq.s32.totalorder %s14, 0
      %p60 = por %p58, %p59
      %p61 = scmp.ne.s32.totalorder %s50, %s53
      %p62 = scmp.eq.s32.totalorder %s19, 1
      %p63 = por %p61, %p62
      %p64 = scmp.ne.s32.totalorder %s53, %s54
      %p65 = scmp.eq.s32.totalorder %s19, 0
      %p66 = por %p64, %p65
      %p67 = scmp.ne.s32.totalorder %s53, %s54
      %p68 = scmp.eq.s32.totalorder %s20, 1
      %p69 = por %p67, %p68
      %p71 = scmp.ne.s32.totalorder %s54, %s70
      %p72 = scmp.eq.s32.totalorder %s20, 0
      %p73 = por %p71, %p72
      %s74 = ssub.s32 %s14, %s21
      %p75 = scmp.eq.s32.totalorder %s74, 0
      %s77 = sadd.s32 %s76, 1
      %s78 = scalar_select %p75, %s76, %s77
      %p81 = pneg %p75
      %p82 = scmp.eq.s32.totalorder %s14, 1
      %p83 = por %p81, %p82
      %p84 = scmp.ne.s32.totalorder %s76, %s79
      %p85 = scmp.eq.s32.totalorder %s14, 0
      %p86 = por %p84, %p85
      %p87 = scmp.ne.s32.totalorder %s76, %s79
      %p88 = scmp.eq.s32.totalorder %s19, 1
      %p89 = por %p87, %p88
      %p90 = scmp.ne.s32.totalorder %s79, %s80
      %p91 = scmp.eq.s32.totalorder %s19, 0
      %p92 = por %p90, %p91
      %p93 = scmp.ne.s32.totalorder %s79, %s80
      %p94 = scmp.eq.s32.totalorder %s20, 1
      %p95 = por %p93, %p94
      %p97 = scmp.ne.s32.totalorder %s80, %s96
      %p98 = scmp.eq.s32.totalorder %s20, 0
      %p99 = por %p97, %p98
      %s101 = sadd.s32 %s100, 1
      %p104 = scmp.eq.s32.totalorder %s14, 1
      %p105 = scmp.ne.s32.totalorder %s100, %s102
      %p106 = scmp.eq.s32.totalorder %s14, 0
      %p107 = por %p105, %p106
      %p108 = scmp.ne.s32.totalorder %s100, %s102
      %p109 = scmp.eq.s32.totalorder %s19, 1
      %p110 = por %p108, %p109
      %p111 = scmp.ne.s32.totalorder %s102, %s103
      %p112 = scmp.eq.s32.totalorder %s19, 0
      %p113 = por %p111, %p112
      %p114 = scmp.ne.s32.totalorder %s102, %s103
      %p115 = scmp.eq.s32.totalorder %s20, 1
      %p116 = por %p114, %p115
      %p118 = scmp.ne.s32.totalorder %s103, %s117
      %p119 = scmp.eq.s32.totalorder %s20, 0
      %p120 = por %p118, %p119
      %s121 = ssub.s32 %s14, %s21
      %p122 = scmp.eq.s32.totalorder %s121, 0
      %s124 = sadd.s32 %s123, 1
      %s125 = scalar_select %p122, %s123, %s124
      %p128 = pneg %p122
      %p129 = scmp.eq.s32.totalorder %s14, 1
      %p130 = por %p128, %p129
      %p131 = scmp.ne.s32.totalorder %s123, %s126
      %p132 = scmp.eq.s32.totalorder %s14, 0
      %p133 = por %p131, %p132
      %p134 = scmp.ne.s32.totalorder %s123, %s126
      %p135 = scmp.eq.s32.totalorder %s19, 1
      %p136 = por %p134, %p135
      %p137 = scmp.ne.s32.totalorder %s126, %s127
      %p138 = scmp.eq.s32.totalorder %s19, 0
      %p139 = por %p137, %p138
      %p140 = scmp.ne.s32.totalorder %s126, %s127
      %p141 = scmp.eq.s32.totalorder %s20, 1
      %p142 = por %p140, %p141
      %p144 = scmp.ne.s32.totalorder %s127, %s143
      %p145 = scmp.eq.s32.totalorder %s20, 0
      %p146 = por %p144, %p145
      %p147 = scmp.le.s32.totalorder 1, %s14
      %p148 = scmp.lt.s32.totalorder %s14, 3
      %p149 = pnand %p147, %p148
      %p150 = pneg %p149
      // Predicated region
      $region9: #{tpu_custom_call.1} parent=5 // pred_check
        _
      $region10: #{tpu_custom_call.1} parent=5 // pred_check_branch
        %152 = sbr.rel (%p149) target = $region12
      $region11: #{tpu_custom_call.1} parent=5 // pred_region
        %s153 = ssub.s32 %s14, 1
        // Predicated region
        $region13: #{tpu_custom_call.1} parent=11 // pred_check
          %p154 = pneg %p113
        $region14: #{tpu_custom_call.1} parent=11 // pred_check_branch
          %156 = sbr.rel (%p154) target = $region16
        $region15: #{tpu_custom_call.1} parent=11 // pred_region
          %158 = vsyncadd [#allocation3], 0
          %s159 = sshll.u32 %s3, 4
          %s160 = int_to_ptr.hbm [resolvable:$true] %s159
          %s161 = sshll.u32 [#allocation2], 4
          %s162 = int_to_ptr.vmem [resolvable:$true] %s161
          %167 = dma.hbm_to_vmem [thread:$0]  %s160, 2048, %s162, [#allocation3], 128, 128, 8
        $region16: #{tpu_custom_call.1} parent=11 // pred_fallthru
          _
      $region12: #{tpu_custom_call.1} parent=5 // pred_fallthru
        _
      %p168 = scmp.lt.s32.totalorder %s14, 2
      // Predicated region
      $region17: #{tpu_custom_call.1} parent=5 // pred_check
        %p169 = pneg %p168
      $region18: #{tpu_custom_call.1} parent=5 // pred_check_branch
        %171 = sbr.rel (%p169) target = $region20
      $region19: #{tpu_custom_call.1} parent=5 // pred_region
        // Predicated region
        $region21: #{tpu_custom_call.1} parent=19 // pred_check
          %p172 = pneg %p34
        $region22: #{tpu_custom_call.1} parent=19 // pred_check_branch
          %174 = sbr.rel (%p172) target = $region24
        $region23: #{tpu_custom_call.1} parent=19 // pred_region
          %p175 = scmp.lt.s32.totalorder %s14, 1
          %s176 = scalar_select %p175, %s14, 1
          %s177 = smul.addr %s176, 8
          %s178 = scalar_lea.vmem %s0, %s177
        $region24: #{tpu_custom_call.1} parent=19 // pred_fallthru
          _
        // Predicated region
        $region25: #{tpu_custom_call.1} parent=19 // pred_check
          %p179 = pneg %p60
        $region26: #{tpu_custom_call.1} parent=19 // pred_check_branch
          %181 = sbr.rel (%p179) target = $region28
        $region27: #{tpu_custom_call.1} parent=19 // pred_region
          %p182 = scmp.lt.s32.totalorder %s14, 1
          %s183 = scalar_select %p182, %s14, 1
          %s184 = smul.addr %s183, 8
          %s185 = scalar_lea.vmem %s1, %s184
        $region28: #{tpu_custom_call.1} parent=19 // pred_fallthru
          _
        // Predicated region
        $region29: #{tpu_custom_call.1} parent=19 // pred_check
          %p186 = pneg %p86
        $region30: #{tpu_custom_call.1} parent=19 // pred_check_branch
          %188 = sbr.rel (%p186) target = $region32
        $region31: #{tpu_custom_call.1} parent=19 // pred_region
          %p189 = scmp.lt.s32.totalorder %s14, 1
          %s190 = scalar_select %p189, %s14, 1
          %s191 = smul.addr %s190, 8
          %s192 = scalar_lea.vmem %s2, %s191
        $region32: #{tpu_custom_call.1} parent=19 // pred_fallthru
          _
      $region20: #{tpu_custom_call.1} parent=5 // pred_fallthru
        _
      %p193 = scmp.le.s32.totalorder 1, %s14
      %p194 = scmp.lt.s32.totalorder %s14, 3
      %p195 = pnand %p193, %p194
      %p196 = pneg %p195
      // Predicated region
      $region33: #{tpu_custom_call.1} parent=5 // pred_check
        _
      $region34: #{tpu_custom_call.1} parent=5 // pred_check_branch
        %198 = sbr.rel (%p195) target = $region36
      $region35: #{tpu_custom_call.1} parent=5 // pred_region
        %s199 = ssub.s32 %s14, 1
        // Predicated region
        $region37: #{tpu_custom_call.1} parent=35 // pred_check
          %p200 = pneg %p113
        $region38: #{tpu_custom_call.1} parent=35 // pred_check_branch
          %202 = sbr.rel (%p200) target = $region40
        $region39: #{tpu_custom_call.1} parent=35 // pred_region
          %204 = dma.done [#allocation3], 2048
        $region40: #{tpu_custom_call.1} parent=35 // pred_fallthru
          _
        %p205 = scmp.lt.s32.totalorder %s19, 1
        %s206 = scalar_select %p205, %s19, 1
        %s207 = smul.addr %s206, 8
        %s208 = scalar_lea.vmem %s0, %s207
        %p209 = pneg %p40
        %p210 = pneg %p37
        %p211 = scmp.lt.s32.totalorder %s19, 1
        %s212 = scalar_select %p211, %s19, 1
        %s213 = smul.addr %s212, 8
        %s214 = scalar_lea.vmem %s1, %s213
        %p215 = pneg %p66
        %p216 = pneg %p63
        %p217 = scmp.lt.s32.totalorder %s19, 1
        %s218 = scalar_select %p217, %s19, 1
        %s219 = smul.addr %s218, 8
        %s220 = scalar_lea.vmem %s2, %s219
        %p221 = pneg %p92
        %p222 = pneg %p89
        %p223 = pneg %p113
        %p224 = pneg %p110
        %p225 = pneg %p139
        %p226 = pneg %p136
        %s227 = sand.u32 %s126, 1
        %s228 = scalar_lea.sflag [#allocation4], %s227
        %s229 = sand.u32 %s126, 1
        %s230 = smul.addr %s229, 8
        %s231 = scalar_lea.vmem [#allocation5], %s230
        %p232 = scmp.lt.s32.totalorder %s19, 1
        %s233 = scalar_select %p232, %s19, 1
        %s234 = smul.addr %s233, 8
        %s235 = scalar_lea.vmem %s0, %s234
        %p236 = scmp.lt.s32.totalorder %s19, 1
        %s237 = scalar_select %p236, %s19, 1
        %s238 = smul.addr %s237, 8
        %s239 = scalar_lea.vmem %s1, %s238
        %p240 = scmp.lt.s32.totalorder %s19, 1
        %s241 = scalar_select %p240, %s19, 1
        %s242 = smul.addr %s241, 8
        %s243 = scalar_lea.vmem %s2, %s242
        %v244 = vld [vmem:[%s235] sm:$0xff]
        %v245 = vld [vmem:[%s239] sm:$0xff]
        %v246 = vadd.s32 %v245, 50
        %v247 = vld [vmem:[%s243] sm:$0xff]
        %v248 = vadd.s32 %v247, 66
        %v249 = vlaneseq
        %v250 = vand.u32 %v249, 127
        %251 = vset.pattern.permute.xlu0 0
        %252 = vperm.xlu0 %251, %v244
        %v253 = vpop.permute.xlu0 %252
        %vm254 = vcmp.eq.s32.totalorder %v250, %v253
        %255 = vset.pattern.permute.xlu0 0
        %256 = vperm.xlu0 %255, %v246
        %v257 = vpop.permute.xlu0 %256
        %vm258 = vcmp.eq.s32.totalorder %v250, %v257
        %vm259 = vmor %vm254, %vm258
        %260 = vset.pattern.permute.xlu0 0
        %261 = vperm.xlu0 %260, %v248
        %v262 = vpop.permute.xlu0 %261
        %vm263 = vcmp.eq.s32.totalorder %v250, %v262
        %vm264 = vmor %vm259, %vm263
        %v265 = vsel %vm264, 1, 0
        %v266 = vcvt.s32.f32 %v265
        %v267 = vld [vmem:[#allocation2] sm:$0xff]
        %v268 = vld [vmem:[#allocation2 + $0x8] sm:$0xff]
        %v269 = vld [vmem:[#allocation2 + $0x10] sm:$0xff]
        %v270 = vld [vmem:[#allocation2 + $0x18] sm:$0xff]
        %v271 = vld [vmem:[#allocation2 + $0x20] sm:$0xff]
        %v272 = vld [vmem:[#allocation2 + $0x28] sm:$0xff]
        %v273 = vld [vmem:[#allocation2 + $0x30] sm:$0xff]
        %v274 = vld [vmem:[#allocation2 + $0x38] sm:$0xff]
        %v275 = vld [vmem:[#allocation2 + $0x40] sm:$0xff]
        %v276 = vld [vmem:[#allocation2 + $0x48] sm:$0xff]
        %v277 = vld [vmem:[#allocation2 + $0x50] sm:$0xff]
        %v278 = vld [vmem:[#allocation2 + $0x58] sm:$0xff]
        %v279 = vld [vmem:[#allocation2 + $0x60] sm:$0xff]
        %v280 = vld [vmem:[#allocation2 + $0x68] sm:$0xff]
        %v281 = vld [vmem:[#allocation2 + $0x70] sm:$0xff]
        %v282 = vld [vmem:[#allocation2 + $0x78] sm:$0xff]
        %283 = vmatpush.msra.mxu0 %v282
        %284 = vmatpush.msra.mxu0 %v281
        %285 = vmatpush.msra.mxu0 %v280
        %286 = vmatpush.msra.mxu0 %v279
        %287 = vmatpush.msra.mxu0 %v278
        %288 = vmatpush.msra.mxu0 %v277
        %289 = vmatpush.msra.mxu0 %v276
        %290 = vmatpush.msra.mxu0 %v275
        %291 = vmatpush.msra.mxu0 %v274
        %292 = vmatpush.msra.mxu0 %v273
        %293 = vmatpush.msra.mxu0 %v272
        %294 = vmatpush.msra.mxu0 %v271
        %295 = vmatpush.msra.mxu0 %v270
        %296 = vmatpush.msra.mxu0 %v269
        %297 = vmatpush.msra.mxu0 %v268
        %298 = vmatpush.msra.mxu0 %v267
        %299 = vmatmul.f32.gmra.mxu0 %v266
        %v300 = vpop.f32.mrf.mxu0
        %v301 = vadd.f32 0.0, %v300
        %302 = vdwg.mxu0
        %303 = vst [vmem:[%s231] sm:$0xff] %v301
        %s304 = sand.u32 %s126, 1
        %s305 = scalar_lea.sflag [#allocation4], %s304
        %s306 = sand.u32 %s126, 1
        %s307 = smul.addr %s306, 8
        %s308 = scalar_lea.vmem [#allocation5], %s307
        // Predicated region
        $region41: #{tpu_custom_call.1} parent=35 // pred_check
          %p309 = pneg %p136
        $region42: #{tpu_custom_call.1} parent=35 // pred_check_branch
          %311 = sbr.rel (%p309) target = $region44
        $region43: #{tpu_custom_call.1} parent=35 // pred_region
          %313 = vsyncadd %s305, 0
          %s314 = smul.addr %s19, 8
          %s315 = scalar_lea.hbm %s4, %s314
          %s317 = sshll.u32 %s308, 4
          %s318 = int_to_ptr.vmem [resolvable:$true] %s317
          %s319 = sshll.u32 %s315, 4
          %s320 = int_to_ptr.hbm [resolvable:$true] %s319
          %322 = dma.vmem_to_hbm [thread:$0]  %s318, 128, %s320, %s305
        $region44: #{tpu_custom_call.1} parent=35 // pred_fallthru
          _
      $region36: #{tpu_custom_call.1} parent=5 // pred_fallthru
        _
      %p323 = scmp.le.s32.totalorder 2, %s14
      // Predicated region
      $region45: #{tpu_custom_call.1} parent=5 // pred_check
        %p324 = pneg %p323
      $region46: #{tpu_custom_call.1} parent=5 // pred_check_branch
        %326 = sbr.rel (%p324) target = $region48
      $region47: #{tpu_custom_call.1} parent=5 // pred_region
        %s327 = ssub.s32 %s14, 2
        // Predicated region
        $region49: #{tpu_custom_call.1} parent=47 // pred_check
          %p328 = pneg %p142
        $region50: #{tpu_custom_call.1} parent=47 // pred_check_branch
          %330 = sbr.rel (%p328) target = $region52
        $region51: #{tpu_custom_call.1} parent=47 // pred_region
          %s331 = sand.u32 %s127, 1
          %s332 = scalar_lea.sflag [#allocation4], %s331
          %s333 = sand.u32 %s127, 1
          %s334 = smul.addr %s333, 8
          %s335 = scalar_lea.vmem [#allocation5], %s334
          %337 = dma.done %s332, 128
        $region52: #{tpu_custom_call.1} parent=47 // pred_fallthru
          _
      $region48: #{tpu_custom_call.1} parent=5 // pred_fallthru
        _
    $region6: #{tpu_custom_call.1} parent=1 // loop_footer
      %s18 = sadd.s32 1, %s14
    $region7: #{tpu_custom_call.1} parent=1 // loop_footer_branch
      %13 = sbr.rel target = $region3
    $region8: #{tpu_custom_call.1} parent=1 // loop_exit
      _
    %338 = vsyncpa [#allocation3], 1
    %s339 = scalar_lea.sflag [#allocation3], 1
    %340 = vsyncpa %s339, 1
    %341 = vsyncpa [#allocation4], 1
    %s342 = scalar_lea.sflag [#allocation4], 1
    %343 = vsyncpa %s342, 1

</llo_original>
